<compile_context>
chip_gen: v7x
topology: tpu7x:2x2x1
jax: 0.10.0
libtpu: 0.0.40
codegen_flags: <defaults>
</compile_context>

<pallas_src>
import functools

import jax
import jax.numpy as jnp
from jax.experimental import pallas as pl
from jax.experimental.pallas import tpu as pltpu


def _center_loss_kernel(x_ref, ct_ref, csq_ref, t_ref, o_ref, sel_ref, *,
                        batch_size, block_b, block_c):
    i = pl.program_id(0)                 # batch tile (parallel)
    j = pl.program_id(1)                 # class tile (innermost, arbitrary)

    @pl.when(j == 0)
    def _init():
        sel_ref[...] = jnp.zeros_like(sel_ref)

    x = x_ref[...]                       # (tb, D)  native dtype feature tile
    ct = ct_ref[...]                     # (D, tc)  native dtype centers^T tile
    csq = csq_ref[...]                   # (1, tc)  f32 ||c_j||^2
    t = t_ref[...]                       # (tb, 1)  int32 labels

    tb = x.shape[0]
    tc = ct.shape[1]

    # <x_i, c_j> on the MXU: native-dtype operands, f32 accumulation.
    xc = jnp.dot(x, ct, preferred_element_type=jnp.float32)       # (tb, tc)
    vals = csq - 2.0 * xc                                         # (tb, tc) f32

    # One-hot select of the label column.  Each label matches exactly one class
    # tile, so summing the masked values across class tiles is exact.
    cls_idx = j * block_c + jax.lax.broadcasted_iota(jnp.int32, (tb, tc), 1)
    sel_ref[...] += jnp.sum(jnp.where(cls_idx == t, vals, 0.0),
                            axis=-1, keepdims=True)               # (tb, 1) f32

    @pl.when(j == pl.num_programs(1) - 1)
    def _finalize():
        xf = x.astype(jnp.float32)                                # no-op for f32 input
        xsq = jnp.sum(xf * xf, axis=-1, keepdims=True)            # (tb, 1)
        dist = jnp.clip(xsq + sel_ref[...], 1e-12, 1e12)          # clamp on (tb, 1)
        # Ragged last batch tile: zero out rows past the true batch size.
        row_idx = i * block_b + jax.lax.broadcasted_iota(jnp.int32, (tb, 1), 0)
        o_ref[...] = jnp.where(row_idx < batch_size, dist, 0.0)


def _round_down(v, m):
    return max(m, (v // m) * m)


def _vmem_physical_bytes():
    try:
        return int(pltpu.get_tpu_info().vmem_capacity_bytes)
    except Exception:
        return 64 * 1024 * 1024          # conservative: v7x has 64 MiB per TensorCore


def _estimate_vmem(tb, tc, feat_dim, itemsize):
    # Double-buffered input tiles (+ lane/sublane padding for narrow tiles)
    # plus the live (tb, tc) f32 intermediates (xc, vals, masked select).
    return (2 * tb * feat_dim * itemsize          # x tile
            + 2 * feat_dim * tc * itemsize        # centers^T tile
            + 2 * 8 * max(tc, 128) * 4            # ||c||^2 tile (sublane padded)
            + 4 * tb * 128 * 4                    # labels + per-row output (lane padded)
            + tb * 128 * 4                        # (tb, 1) f32 scratch
            + 3 * tb * tc * 4)                    # f32 intermediates


def _choose_tiles(batch, num_classes, feat_dim, itemsize, budget):
    # Sub-32-bit dtypes pack along sublanes -> coarser batch-tile granularity.
    sub = {1: 32, 2: 16}.get(itemsize, 8)
    if batch <= sub:
        tb = batch
    else:
        tb = _round_down(min(512, batch), sub)    # >= 512 rows preferred for HBM streaming
    tc = num_classes
    # Shrink the class tile (multiples of 128), then the batch tile, to fit VMEM.
    while _estimate_vmem(tb, tc, feat_dim, itemsize) > budget and tc > 128:
        tc = _round_down((tc + 1) // 2, 128)
    while _estimate_vmem(tb, tc, feat_dim, itemsize) > budget and tb > sub:
        tb = _round_down(tb // 2, sub)
    return tb, tc


def center_loss(x, centers, labels, *, block_b=None, block_c=None):
    """x: (B, D) features; centers: (C, D); labels: (B,) int. Returns scalar f32 loss."""
    B, D = x.shape
    C, Dc = centers.shape
    assert D == Dc, (D, Dc)
    itemsize = jnp.dtype(x.dtype).itemsize

    phys_vmem = _vmem_physical_bytes()
    tb, tc = _choose_tiles(B, C, D, itemsize, budget=int(phys_vmem * 0.6))
    if block_b is not None:               # test / tuning overrides
        tb = min(int(block_b), B)
    if block_c is not None:
        tc = min(int(block_c), C)

    grid = (pl.cdiv(B, tb), pl.cdiv(C, tc))

    labels_2d = labels.astype(jnp.int32).reshape(B, 1)
    centers_t = jnp.swapaxes(centers, 0, 1)                              # (D, C) native dtype
    centers_sqnorm = jnp.sum(jnp.square(centers.astype(jnp.float32)),
                             axis=1).reshape(1, C)                       # (1, C) f32

    kernel = functools.partial(_center_loss_kernel,
                               batch_size=B, block_b=tb, block_c=tc)

    est_vmem = _estimate_vmem(tb, tc, D, itemsize)
    params = dict(dimension_semantics=("parallel", "arbitrary"))
    if est_vmem > 16 * 1024 * 1024:
        # Never request more than ~3/4 of physical VMEM (v7x has only 64 MiB).
        params["vmem_limit_bytes"] = int(min(est_vmem * 2, phys_vmem * 3 // 4))

    cost = pl.CostEstimate(
        flops=2 * B * C * D,
        transcendentals=0,
        bytes_accessed=(B * D + C * D) * itemsize + (B + C) * 4 + B * 4)

    per_row = pl.pallas_call(
        kernel,
        out_shape=jax.ShapeDtypeStruct((B, 1), jnp.float32),
        grid_spec=pltpu.PrefetchScalarGridSpec(
            num_scalar_prefetch=0,
            grid=grid,
            in_specs=[
                pl.BlockSpec((tb, D), lambda i, j: (i, 0)),   # x tile (streamed)
                pl.BlockSpec((D, tc), lambda i, j: (0, j)),   # centers^T (class tiled)
                pl.BlockSpec((1, tc), lambda i, j: (0, j)),   # ||c||^2 (class tiled)
                pl.BlockSpec((tb, 1), lambda i, j: (i, 0)),   # labels tile (streamed)
            ],
            out_specs=pl.BlockSpec((tb, 1), lambda i, j: (i, 0)),   # per-row distance
            scratch_shapes=[pltpu.VMEM((tb, 1), jnp.float32)],      # per-row select acc
        ),
        compiler_params=pltpu.CompilerParams(**params),
        cost_estimate=cost,
    )(x, centers_t, centers_sqnorm, labels_2d)

    # Exactly one selected entry per row -> mean over the true batch size.
    return jnp.sum(per_row) / jnp.float32(B)


def _reference(x, centers, labels):
    """Pure-JAX CenterLoss matching the PyTorch module."""
    B, _ = x.shape
    C = centers.shape[0]
    x = x.astype(jnp.float32)
    centers = centers.astype(jnp.float32)
    distmat = (jnp.sum(x ** 2, axis=1, keepdims=True)
               + jnp.sum(centers ** 2, axis=1)[None, :]
               - 2.0 * x @ centers.T)
    mask = labels[:, None] == jnp.arange(C, dtype=labels.dtype)[None, :]
    dist = jnp.where(mask, jnp.clip(distmat, 1e-12, 1e12), 0.0)
    return jnp.sum(dist) / B   # exactly one selected entry per row -> mean


if __name__ == "__main__":
    key = jax.random.PRNGKey(0)
    k1, k2, k3 = jax.random.split(key, 3)

    batch, num_classes, feat_dim = 20, 256, 32
    x = jax.random.normal(k1, (batch, feat_dim), dtype=jnp.float32)
    centers = jax.random.normal(k2, (num_classes, feat_dim), dtype=jnp.float32)
    labels = jax.random.randint(k3, (batch,), 0, num_classes, dtype=jnp.int32)

    # Force small tiles: grid = (3 batch tiles incl. a ragged one, 2 class tiles),
    # so the parallel batch axis, the class-tile accumulation and the row mask
    # are all exercised.
    loss = center_loss(x, centers, labels, block_b=8, block_c=128)
    loss = jax.block_until_ready(loss)

    ref = _reference(x, centers, labels)
    assert jnp.allclose(loss, ref, rtol=1e-4, atol=1e-4), (loss, ref)

    print("KERNEL_OK")
</pallas_src>

<mosaic_0001>
module attributes {stable_mosaic.version = 11 : i64} {
  func.func @_center_loss_kernel(%arg0: i32, %arg1: i32, %arg2: memref<8x32xf32, #tpu.memory_space<vmem>>, %arg3: memref<32x128xf32, #tpu.memory_space<vmem>>, %arg4: memref<1x128xf32, #tpu.memory_space<vmem>>, %arg5: memref<8x1xi32, #tpu.memory_space<vmem>>, %arg6: memref<8x1xf32, #tpu.memory_space<vmem>>, %arg7: memref<8x1xf32, #tpu.memory_space<vmem>>) attributes {dimension_semantics = [#tpu.dimension_semantics<parallel>, #tpu.dimension_semantics<arbitrary>], iteration_bounds = array<i64: 3, 2>, scalar_prefetch = 0 : i64, scratch_operands = 1 : i64, tpu.core_type = #tpu.core_type<tc>, window_params = [{transform_indices = @transform_0, window_bounds = array<i64: 8, 32>}, {transform_indices = @transform_1, window_bounds = array<i64: 32, 128>}, {transform_indices = @transform_2, window_bounds = array<i64: 1, 128>}, {transform_indices = @transform_3, window_bounds = array<i64: 8, 1>}, {transform_indices = @transform_4, window_bounds = array<i64: 8, 1>}]} {
    %c0_i32 = arith.constant 0 : i32
    %0 = arith.cmpi eq, %arg1, %c0_i32 : i32
    %1 = arith.extui %0 : i1 to i32
    %c0_i32_0 = arith.constant 0 : i32
    %2 = arith.cmpi ne, %1, %c0_i32_0 : i32
    scf.if %2 {
      %cst_16 = arith.constant 0.000000e+00 : f32
      %28 = vector.broadcast %cst_16 : f32 to vector<8x1xf32>
      %c0_17 = arith.constant 0 : index
      %c0_18 = arith.constant 0 : index
      %29 = vector.load %arg7[%c0_17, %c0_18] : memref<8x1xf32, #tpu.memory_space<vmem>>, vector<8x1xf32>
      tpu.vector_store %arg7[%c0_17, %c0_18], %28 {strides = array<i32>} : memref<8x1xf32, #tpu.memory_space<vmem>>, vector<8x1xf32>,
    } else {
    }
    %c0 = arith.constant 0 : index
    %c0_1 = arith.constant 0 : index
    %3 = vector.load %arg2[%c0, %c0_1] : memref<8x32xf32, #tpu.memory_space<vmem>>, vector<8x32xf32>
    %c0_2 = arith.constant 0 : index
    %c0_3 = arith.constant 0 : index
    %4 = vector.load %arg3[%c0_2, %c0_3] : memref<32x128xf32, #tpu.memory_space<vmem>>, vector<32x128xf32>
    %c0_4 = arith.constant 0 : index
    %c0_5 = arith.constant 0 : index
    %5 = vector.load %arg4[%c0_4, %c0_5] : memref<1x128xf32, #tpu.memory_space<vmem>>, vector<1x128xf32>
    %c0_6 = arith.constant 0 : index
    %c0_7 = arith.constant 0 : index
    %6 = vector.load %arg5[%c0_6, %c0_7] : memref<8x1xi32, #tpu.memory_space<vmem>>, vector<8x1xi32>
    %cst = arith.constant dense<0.000000e+00> : vector<8x128xf32>
    %7 = tpu.matmul %3, %4, %cst {dimension_numbers = #tpu.dot_dimension_numbers<[1], [0], [0], [1], [0, 0, 1, 1], [], []>} : vector<8x32xf32>, vector<32x128xf32>, vector<8x128xf32> -> vector<8x128xf32>
    %cst_8 = arith.constant 2.000000e+00 : f32
    %8 = vector.broadcast %cst_8 : f32 to vector<8x128xf32>
    %9 = arith.mulf %8, %7 : vector<8x128xf32>
    %10 = vector.broadcast %5 : vector<1x128xf32> to vector<8x128xf32>
    %11 = arith.subf %10, %9 : vector<8x128xf32>
    %c128_i32 = arith.constant 128 : i32
    %12 = arith.muli %arg1, %c128_i32 : i32
    %13 = tpu.iota {dimensions = array<i32: 1>} : vector<8x128xi32>
    %14 = vector.broadcast %12 : i32 to vector<8x128xi32>
    %15 = arith.addi %14, %13 : vector<8x128xi32>
    %c0_9 = arith.constant 0 : index
    %c0_10 = arith.constant 0 : index
    %16 = vector.load %arg7[%c0_9, %c0_10] : memref<8x1xf32, #tpu.memory_space<vmem>>, vector<8x1xf32>
    %17 = vector.broadcast %6 : vector<8x1xi32> to vector<8x128xi32>
    %18 = arith.cmpi eq, %15, %17 : vector<8x128xi32>
    %cst_11 = arith.constant 0.000000e+00 : f32
    %19 = vector.broadcast %cst_11 : f32 to vector<8x128xf32>
    %20 = arith.select %18, %11, %19 : vector<8x128xi1>, vector<8x128xf32>
    %cst_12 = arith.constant dense<0.000000e+00> : vector<8xf32>
    %21 = vector.multi_reduction <add>, %20, %cst_12 [1] : vector<8x128xf32> to vector<8xf32>
    %22 = vector.shape_cast %21 : vector<8xf32> to vector<8x1xf32>
    %23 = arith.addf %16, %22 : vector<8x1xf32>
    %c0_13 = arith.constant 0 : index
    %c0_14 = arith.constant 0 : index
    %24 = vector.load %arg7[%c0_13, %c0_14] : memref<8x1xf32, #tpu.memory_space<vmem>>, vector<8x1xf32>
    tpu.vector_store %arg7[%c0_13, %c0_14], %23 {strides = array<i32>} : memref<8x1xf32, #tpu.memory_space<vmem>>, vector<8x1xf32>,
    %c1_i32 = arith.constant 1 : i32
    %25 = arith.cmpi eq, %arg1, %c1_i32 : i32
    %26 = arith.extui %25 : i1 to i32
    %c0_i32_15 = arith.constant 0 : i32
    %27 = arith.cmpi ne, %26, %c0_i32_15 : i32
    scf.if %27 {
      %28 = arith.mulf %3, %3 : vector<8x32xf32>
      %cst_16 = arith.constant dense<0.000000e+00> : vector<8xf32>
      %29 = vector.multi_reduction <add>, %28, %cst_16 [1] : vector<8x32xf32> to vector<8xf32>
      %30 = vector.shape_cast %29 : vector<8xf32> to vector<8x1xf32>
      %c0_17 = arith.constant 0 : index
      %c0_18 = arith.constant 0 : index
      %31 = vector.load %arg7[%c0_17, %c0_18] : memref<8x1xf32, #tpu.memory_space<vmem>>, vector<8x1xf32>
      %32 = arith.addf %30, %31 : vector<8x1xf32>
      %cst_19 = arith.constant 9.99999996E-13 : f32
      %cst_20 = arith.constant 9.99999995E+11 : f32
      %33 = vector.broadcast %cst_19 : f32 to vector<8x1xf32>
      %34 = arith.maximumf %33, %32 : vector<8x1xf32>
      %35 = vector.broadcast %cst_20 : f32 to vector<8x1xf32>
      %36 = arith.minimumf %35, %34 : vector<8x1xf32>
      %c8_i32 = arith.constant 8 : i32
      %37 = arith.muli %arg0, %c8_i32 : i32
      %38 = tpu.iota {dimensions = array<i32: 0>} : vector<8x1xi32>
      %39 = vector.broadcast %37 : i32 to vector<8x1xi32>
      %40 = arith.addi %39, %38 : vector<8x1xi32>
      %c20_i32 = arith.constant 20 : i32
      %41 = vector.broadcast %c20_i32 : i32 to vector<8x1xi32>
      %42 = arith.cmpi slt, %40, %41 : vector<8x1xi32>
      %cst_21 = arith.constant 0.000000e+00 : f32
      %43 = vector.broadcast %cst_21 : f32 to vector<8x1xf32>
      %44 = arith.select %42, %36, %43 : vector<8x1xi1>, vector<8x1xf32>
      %c0_22 = arith.constant 0 : index
      %c0_23 = arith.constant 0 : index
      %45 = vector.load %arg6[%c0_22, %c0_23] : memref<8x1xf32, #tpu.memory_space<vmem>>, vector<8x1xf32>
      tpu.vector_store %arg6[%c0_22, %c0_23], %44 {strides = array<i32>} : memref<8x1xf32, #tpu.memory_space<vmem>>, vector<8x1xf32>,
    } else {
    }
    return
  }
  func.func @transform_0(%arg0: i32, %arg1: i32) -> (i32, i32) {
    %c0_i32 = arith.constant 0 : i32
    %c0_i32_0 = arith.constant 0 : i32
    return %arg0, %c0_i32 : i32, i32
  }
  func.func @transform_1(%arg0: i32, %arg1: i32) -> (i32, i32) {
    %c0_i32 = arith.constant 0 : i32
    %c0_i32_0 = arith.constant 0 : i32
    return %c0_i32, %arg1 : i32, i32
  }
  func.func @transform_2(%arg0: i32, %arg1: i32) -> (i32, i32) {
    %c0_i32 = arith.constant 0 : i32
    %c0_i32_0 = arith.constant 0 : i32
    return %c0_i32, %arg1 : i32, i32
  }
  func.func @transform_3(%arg0: i32, %arg1: i32) -> (i32, i32) {
    %c0_i32 = arith.constant 0 : i32
    %c0_i32_0 = arith.constant 0 : i32
    return %arg0, %c0_i32 : i32, i32
  }
  func.func @transform_4(%arg0: i32, %arg1: i32) -> (i32, i32) {
    %c0_i32 = arith.constant 0 : i32
    %c0_i32_0 = arith.constant 0 : i32
    return %arg0, %c0_i32 : i32, i32
  }
}

</mosaic_0001>

<llo_original>
// kernel: tpu_custom_call.1
$region0: #{tpu_custom_call.1}
  #allocation0 [shape = 'u32[]', space=smem, size = 0x4, offset = 0x4, fixed_abs, tag = 'smem constant byte address 0x4 - core index']
  #allocation1 [shape = 'u32[144,128]{1,0:T(1,128)}', space=vmem, size = 0x12000, scoped, tag = 'internal scratch']
  #allocation2 [shape = 'f32[8,1]{1,0:T(8,128)}', space=vmem, size = 0x1000, scoped, tag = 'scratch operand']
  %s0 = inlined_call_operand.vmem [shape: f32[20,32], index: 0, kind: input, shape index: {}]
  %s1 = inlined_call_operand.hbm [shape: f32[32,256], index: 1, kind: input, shape index: {}]
  %s2 = inlined_call_operand.vmem [shape: f32[1,256], index: 2, kind: input, shape index: {}]
  %s3 = inlined_call_operand.vmem [shape: s32[20,1], index: 3, kind: input, shape index: {}]
  %s4 = inlined_call_operand.vmem [shape: f32[20,1], index: 4, kind: output, shape index: {}]
  %s5 = sld [smem:[#allocation0]]
  $region61: #{tpu_custom_call.1} parent=0
    _
  %s7 = ssub.s32 1, %s5
  %s8 = scalar_select 0, %s7, %s5
  $region1: #{tpu_custom_call.1} parent=0
    #allocation3 [shape = 'u8[32768]{0}', space=vmem, size = 0x8000, scoped, tag = 'input window, operand 1']
    #allocation4 [shape = 's32[2]{0}', space=sflag, size = 0x8, scoped, tag = 'scoped memory for tpu_custom_call.1']
    %9 = vsyncpa [#allocation4], 0
    %s10 = scalar_lea.sflag [#allocation4], 1
    %11 = vsyncpa %s10, 0
    loop: start=0, step=1, limit=8
    $region2: #{tpu_custom_call.1} parent=1 // loop_pre_header
      _
    $region3: #{tpu_custom_call.1} parent=1 // loop_header
      %s13 = sphi 0, %s17
      %p14 = scmp.ge.s32.totalorder %s13, 8
      %s20 = sphi 0, %s32
      %s21 = sphi 0, %s28
      %s22 = sphi 0, %s20
      %s23 = sphi 0, %s21
      %s24 = sphi 0, %s22
      %s25 = sphi 0, %s23
      %s35 = sphi 0, %s37
      %s38 = sphi 0, %s35
      %s39 = sphi 0, %s38
      %s55 = sphi 0, %s39
      %s61 = sphi 0, %s63
      %s64 = sphi 0, %s61
      %s65 = sphi 0, %s64
      %s81 = sphi 0, %s65
      %s87 = sphi 0, %s89
      %s90 = sphi 0, %s87
      %s91 = sphi 0, %s90
      %s107 = sphi 0, %s91
      %s113 = sphi 0, %s115
      %s116 = sphi 0, %s113
      %s117 = sphi 0, %s116
      %s133 = sphi 0, %s117
      %s139 = sphi 0, %s141
      %s142 = sphi 0, %s139
      %s143 = sphi 0, %s142
      %s159 = sphi 0, %s143
    $region4: #{tpu_custom_call.1} parent=1 // loop_header_branch
      %16 = sbr.rel (%p14) target = $region8
    $region5: #{tpu_custom_call.1} parent=1 // loop_body
      %s18 = ssub.s32 %s13, 1
      %s19 = ssub.s32 %s13, 2
      %s26 = sadd.s32 1, %s21
      %p27 = scmp.ge.s32.totalorder %s26, 2
      %s28 = scalar_select %p27, 0, %s26
      %s29 = sadd.s32 1, %s20
      %s30 = scalar_select %p27, %s29, %s20
      %p31 = scmp.ge.s32.totalorder %s30, 3
      %s32 = scalar_select %p31, 0, %s30
      %s33 = ssub.s32 %s20, %s32
      %p34 = scmp.eq.s32.totalorder %s33, 0
      %s36 = sadd.s32 %s35, 1
      %s37 = scalar_select %p34, %s35, %s36
      %p40 = pneg %p34
      %p41 = scmp.eq.s32.totalorder %s13, 5
      %p42 = por %p40, %p41
      %p43 = scmp.ne.s32.totalorder %s35, %s38
      %p44 = scmp.eq.s32.totalorder %s13, 0
      %p45 = por %p43, %p44
      %p46 = scmp.ne.s32.totalorder %s35, %s38
      %p47 = scmp.eq.s32.totalorder %s18, 5
      %p48 = por %p46, %p47
      %p49 = scmp.ne.s32.totalorder %s38, %s39
      %p50 = scmp.eq.s32.totalorder %s18, 0
      %p51 = por %p49, %p50
      %p52 = scmp.ne.s32.totalorder %s38, %s39
      %p53 = scmp.eq.s32.totalorder %s19, 5
      %p54 = por %p52, %p53
      %p56 = scmp.ne.s32.totalorder %s39, %s55
      %p57 = scmp.eq.s32.totalorder %s19, 0
      %p58 = por %p56, %p57
      %s59 = ssub.s32 %s21, %s28
      %p60 = scmp.eq.s32.totalorder %s59, 0
      %s62 = sadd.s32 %s61, 1
      %s63 = scalar_select %p60, %s61, %s62
      %p66 = pneg %p60
      %p67 = scmp.eq.s32.totalorder %s13, 5
      %p68 = por %p66, %p67
      %p69 = scmp.ne.s32.totalorder %s61, %s64
      %p70 = scmp.eq.s32.totalorder %s13, 0
      %p71 = por %p69, %p70
      %p72 = scmp.ne.s32.totalorder %s61, %s64
      %p73 = scmp.eq.s32.totalorder %s18, 5
      %p74 = por %p72, %p73
      %p75 = scmp.ne.s32.totalorder %s64, %s65
      %p76 = scmp.eq.s32.totalorder %s18, 0
      %p77 = por %p75, %p76
      %p78 = scmp.ne.s32.totalorder %s64, %s65
      %p79 = scmp.eq.s32.totalorder %s19, 5
      %p80 = por %p78, %p79
      %p82 = scmp.ne.s32.totalorder %s65, %s81
      %p83 = scmp.eq.s32.totalorder %s19, 0
      %p84 = por %p82, %p83
      %s85 = ssub.s32 %s21, %s28
      %p86 = scmp.eq.s32.totalorder %s85, 0
      %s88 = sadd.s32 %s87, 1
      %s89 = scalar_select %p86, %s87, %s88
      %p92 = pneg %p86
      %p93 = scmp.eq.s32.totalorder %s13, 5
      %p94 = por %p92, %p93
      %p95 = scmp.ne.s32.totalorder %s87, %s90
      %p96 = scmp.eq.s32.totalorder %s13, 0
      %p97 = por %p95, %p96
      %p98 = scmp.ne.s32.totalorder %s87, %s90
      %p99 = scmp.eq.s32.totalorder %s18, 5
      %p100 = por %p98, %p99
      %p101 = scmp.ne.s32.totalorder %s90, %s91
      %p102 = scmp.eq.s32.totalorder %s18, 0
      %p103 = por %p101, %p102
      %p104 = scmp.ne.s32.totalorder %s90, %s91
      %p105 = scmp.eq.s32.totalorder %s19, 5
      %p106 = por %p104, %p105
      %p108 = scmp.ne.s32.totalorder %s91, %s107
      %p109 = scmp.eq.s32.totalorder %s19, 0
      %p110 = por %p108, %p109
      %s111 = ssub.s32 %s20, %s32
      %p112 = scmp.eq.s32.totalorder %s111, 0
      %s114 = sadd.s32 %s113, 1
      %s115 = scalar_select %p112, %s113, %s114
      %p118 = pneg %p112
      %p119 = scmp.eq.s32.totalorder %s13, 5
      %p120 = por %p118, %p119
      %p121 = scmp.ne.s32.totalorder %s113, %s116
      %p122 = scmp.eq.s32.totalorder %s13, 0
      %p123 = por %p121, %p122
      %p124 = scmp.ne.s32.totalorder %s113, %s116
      %p125 = scmp.eq.s32.totalorder %s18, 5
      %p126 = por %p124, %p125
      %p127 = scmp.ne.s32.totalorder %s116, %s117
      %p128 = scmp.eq.s32.totalorder %s18, 0
      %p129 = por %p127, %p128
      %p130 = scmp.ne.s32.totalorder %s116, %s117
      %p131 = scmp.eq.s32.totalorder %s19, 5
      %p132 = por %p130, %p131
      %p134 = scmp.ne.s32.totalorder %s117, %s133
      %p135 = scmp.eq.s32.totalorder %s19, 0
      %p136 = por %p134, %p135
      %s137 = ssub.s32 %s20, %s32
      %p138 = scmp.eq.s32.totalorder %s137, 0
      %s140 = sadd.s32 %s139, 1
      %s141 = scalar_select %p138, %s139, %s140
      %p144 = pneg %p138
      %p145 = scmp.eq.s32.totalorder %s13, 5
      %p146 = por %p144, %p145
      %p147 = scmp.ne.s32.totalorder %s139, %s142
      %p148 = scmp.eq.s32.totalorder %s13, 0
      %p149 = por %p147, %p148
      %p150 = scmp.ne.s32.totalorder %s139, %s142
      %p151 = scmp.eq.s32.totalorder %s18, 5
      %p152 = por %p150, %p151
      %p153 = scmp.ne.s32.totalorder %s142, %s143
      %p154 = scmp.eq.s32.totalorder %s18, 0
      %p155 = por %p153, %p154
      %p156 = scmp.ne.s32.totalorder %s142, %s143
      %p157 = scmp.eq.s32.totalorder %s19, 5
      %p158 = por %p156, %p157
      %p160 = scmp.ne.s32.totalorder %s143, %s159
      %p161 = scmp.eq.s32.totalorder %s19, 0
      %p162 = por %p160, %p161
      %p163 = scmp.le.s32.totalorder 1, %s13
      %p164 = scmp.lt.s32.totalorder %s13, 7
      %p165 = pnand %p163, %p164
      %p166 = pneg %p165
      // Predicated region
      $region9: #{tpu_custom_call.1} parent=5 // pred_check
        _
      $region10: #{tpu_custom_call.1} parent=5 // pred_check_branch
        %168 = sbr.rel (%p165) target = $region12
      $region11: #{tpu_custom_call.1} parent=5 // pred_region
        %s169 = ssub.s32 %s13, 1
      $region12: #{tpu_custom_call.1} parent=5 // pred_fallthru
        _
      %p170 = scmp.lt.s32.totalorder %s13, 6
      // Predicated region
      $region13: #{tpu_custom_call.1} parent=5 // pred_check
        %p171 = pneg %p170
      $region14: #{tpu_custom_call.1} parent=5 // pred_check_branch
        %173 = sbr.rel (%p171) target = $region16
      $region15: #{tpu_custom_call.1} parent=5 // pred_region
        // Predicated region
        $region17: #{tpu_custom_call.1} parent=15 // pred_check
          %p174 = pneg %p45
        $region18: #{tpu_custom_call.1} parent=15 // pred_check_branch
          %176 = sbr.rel (%p174) target = $region20
        $region19: #{tpu_custom_call.1} parent=15 // pred_region
          %p177 = scmp.lt.s32.totalorder %s20, 2
          %s178 = scalar_select %p177, %s20, 2
          %s179 = smul.addr %s178, 8
          %s180 = scalar_lea.vmem %s0, %s179
        $region20: #{tpu_custom_call.1} parent=15 // pred_fallthru
          _
        // Predicated region
        $region21: #{tpu_custom_call.1} parent=15 // pred_check
          %p181 = pneg %p71
        $region22: #{tpu_custom_call.1} parent=15 // pred_check_branch
          %183 = sbr.rel (%p181) target = $region24
        $region23: #{tpu_custom_call.1} parent=15 // pred_region
          %s184 = sand.u32 %s61, 1
          %s185 = scalar_lea.sflag [#allocation4], %s184
          %s186 = sand.u32 %s61, 1
          %s187 = smul.addr %s186, 32
          %s188 = scalar_lea.vmem [#allocation3], %s187
          %s190 = ssub.s32 512, 512
          %191 = vsyncadd %s185, %s190
          %s192 = smul.addr %s21, 128
          %s193 = scalar_lea.hbm %s1, %s192
          %s194 = sshll.u32 %s188, 4
          %s195 = int_to_ptr.vmem [resolvable:$true] %s194
          %200 = dma.hbm_to_vmem [thread:$0]  %s193, 512, %s195, %s185, 256, 128, 8
        $region24: #{tpu_custom_call.1} parent=15 // pred_fallthru
          _
        // Predicated region
        $region25: #{tpu_custom_call.1} parent=15 // pred_check
          %p201 = pneg %p97
        $region26: #{tpu_custom_call.1} parent=15 // pred_check_branch
          %203 = sbr.rel (%p201) target = $region28
        $region27: #{tpu_custom_call.1} parent=15 // pred_region
          %p204 = scmp.lt.s32.totalorder %s21, 1
          %s205 = scalar_select %p204, %s21, 1
          %s206 = scalar_lea.vmem %s2, %s205
        $region28: #{tpu_custom_call.1} parent=15 // pred_fallthru
          _
        // Predicated region
        $region29: #{tpu_custom_call.1} parent=15 // pred_check
          %p207 = pneg %p123
        $region30: #{tpu_custom_call.1} parent=15 // pred_check_branch
          %209 = sbr.rel (%p207) target = $region32
        $region31: #{tpu_custom_call.1} parent=15 // pred_region
          %p210 = scmp.lt.s32.totalorder %s20, 2
          %s211 = scalar_select %p210, %s20, 2
          %s212 = smul.addr %s211, 8
          %s213 = scalar_lea.vmem %s3, %s212
        $region32: #{tpu_custom_call.1} parent=15 // pred_fallthru
          _
      $region16: #{tpu_custom_call.1} parent=5 // pred_fallthru
        _
      %p214 = scmp.le.s32.totalorder 1, %s13
      %p215 = scmp.lt.s32.totalorder %s13, 7
      %p216 = pnand %p214, %p215
      %p217 = pneg %p216
      // Predicated region
      $region33: #{tpu_custom_call.1} parent=5 // pred_check
        _
      $region34: #{tpu_custom_call.1} parent=5 // pred_check_branch
        %219 = sbr.rel (%p216) target = $region36
      $region35: #{tpu_custom_call.1} parent=5 // pred_region
        %s220 = ssub.s32 %s13, 1
        %s221 = sand.u32 %s64, 1
        %s222 = scalar_lea.sflag [#allocation4], %s221
        %s223 = sand.u32 %s64, 1
        %s224 = smul.addr %s223, 32
        %s225 = scalar_lea.vmem [#allocation3], %s224
        // Predicated region
        $region37: #{tpu_custom_call.1} parent=35 // pred_check
          %p226 = pneg %p77
        $region38: #{tpu_custom_call.1} parent=35 // pred_check_branch
          %228 = sbr.rel (%p226) target = $region40
        $region39: #{tpu_custom_call.1} parent=35 // pred_region
          %229 = dma.done %s222, 512
        $region40: #{tpu_custom_call.1} parent=35 // pred_fallthru
          _
        %p230 = scmp.lt.s32.totalorder %s22, 2
        %s231 = scalar_select %p230, %s22, 2
        %s232 = smul.addr %s231, 8
        %s233 = scalar_lea.vmem %s0, %s232
        %p234 = pneg %p51
        %p235 = pneg %p48
        %s236 = sand.u32 %s64, 1
        %s237 = scalar_lea.sflag [#allocation4], %s236
        %s238 = sand.u32 %s64, 1
        %s239 = smul.addr %s238, 32
        %s240 = scalar_lea.vmem [#allocation3], %s239
        %p241 = pneg %p77
        %p242 = pneg %p74
        %p243 = scmp.lt.s32.totalorder %s23, 1
        %s244 = scalar_select %p243, %s23, 1
        %s245 = scalar_lea.vmem %s2, %s244
        %p246 = pneg %p103
        %p247 = pneg %p100
        %p248 = scmp.lt.s32.totalorder %s22, 2
        %s249 = scalar_select %p248, %s22, 2
        %s250 = smul.addr %s249, 8
        %s251 = scalar_lea.vmem %s3, %s250
        %p252 = pneg %p129
        %p253 = pneg %p126
        %p254 = pneg %p155
        %p255 = pneg %p152
        %p256 = scmp.lt.s32.totalorder %s22, 2
        %s257 = scalar_select %p256, %s22, 2
        %s258 = smul.addr %s257, 8
        %s259 = scalar_lea.vmem %s4, %s258
        %p260 = scmp.lt.s32.totalorder %s22, 2
        %s261 = scalar_select %p260, %s22, 2
        %s262 = smul.addr %s261, 8
        %s263 = scalar_lea.vmem %s0, %s262
        %p264 = scmp.lt.s32.totalorder %s23, 1
        %s265 = scalar_select %p264, %s23, 1
        %s266 = scalar_lea.vmem %s2, %s265
        %p267 = scmp.lt.s32.totalorder %s22, 2
        %s268 = scalar_select %p267, %s22, 2
        %s269 = smul.addr %s268, 8
        %s270 = scalar_lea.vmem %s3, %s269
        %p271 = scmp.lt.s32.totalorder %s22, 2
        %s272 = scalar_select %p271, %s22, 2
        %s273 = smul.addr %s272, 8
        %s274 = scalar_lea.vmem %s4, %s273
        %p275 = scmp.eq.s32.totalorder %s23, 0
        // Predicated region
        $region41: #{tpu_custom_call.1} parent=35 // pred_check
          %p276 = pneg %p275
        $region42: #{tpu_custom_call.1} parent=35 // pred_check_branch
          %278 = sbr.rel (%p276) target = $region44
        $region43: #{tpu_custom_call.1} parent=35 // pred_region
          %vm279 = vcmask 7168
          %280 = vst.msk [vmem:[#allocation2] sm:$0xff] %vm279, 0.0
        $region44: #{tpu_custom_call.1} parent=35 // pred_fallthru
          _
        %v281 = vld [vmem:[%s263] sm:$0xff]
        %v282 = vld [vmem:[%s225] sm:$0xff]
        %v283 = vld [vmem:[%s225 + $0x8] sm:$0xff]
        %v284 = vld [vmem:[%s225 + $0x10] sm:$0xff]
        %v285 = vld [vmem:[%s225 + $0x18] sm:$0xff]
        %v286 = vld [vmem:[%s266] sm:$0x1]
        %v287 = vld [vmem:[%s270] sm:$0xff]
        %vm288 = vcmask 261120
        %v290 = vsel %vm288, %v281, 0
        %292 = vmatprep.subr.mxu0 0.0
        %293 = vmatpush1.msra.mxu0 %v282
        %294 = vmatprep.subr.mxu0 0.0
        %295 = vmatpush1.msra.mxu0 %v283
        %296 = vmatprep.subr.mxu0 0.0
        %297 = vmatpush1.msra.mxu0 %v284
        %298 = vmatprep.subr.mxu0 0.0
        %299 = vmatpush1.msra.mxu0 %v285
        %300 = vmatprep.subr.mxu0 0.0
        %301 = vmatpush1.msra.mxu0 0.0
        %302 = vmatprep.subr.mxu0 0.0
        %303 = vmatpush1.msra.mxu0 0.0
        %304 = vmatprep.subr.mxu0 0.0
        %305 = vmatpush1.msra.mxu0 0.0
        %306 = vmatprep.subr.mxu0 0.0
        %307 = vmatpush1.msra.mxu0 0.0
        %308 = vmatprep.subr.mxu0 0.0
        %309 = vmatpush1.msra.mxu0 0.0
        %310 = vmatprep.subr.mxu0 0.0
        %311 = vmatpush1.msra.mxu0 0.0
        %312 = vmatprep.subr.mxu0 0.0
        %313 = vmatpush1.msra.mxu0 0.0
        %314 = vmatprep.subr.mxu0 0.0
        %315 = vmatpush1.msra.mxu0 0.0
        %316 = vmatprep.subr.mxu0 0.0
        %317 = vmatpush1.msra.mxu0 0.0
        %318 = vmatprep.subr.mxu0 0.0
        %319 = vmatpush1.msra.mxu0 0.0
        %320 = vmatprep.subr.mxu0 0.0
        %321 = vmatpush1.msra.mxu0 0.0
        %322 = vmatprep.subr.mxu0 0.0
        %323 = vmatpush1.msra.mxu0 0.0
        %324 = vmatprep.subr.mxu0 0.0
        %325 = vmatpush1.msra.mxu0 0.0
        %326 = vmatprep.subr.mxu0 0.0
        %327 = vmatpush1.msra.mxu0 0.0
        %328 = vmatprep.subr.mxu0 0.0
        %329 = vmatpush1.msra.mxu0 0.0
        %330 = vmatprep.subr.mxu0 0.0
        %331 = vmatpush1.msra.mxu0 0.0
        %332 = vmatprep.subr.mxu0 0.0
        %333 = vmatpush1.msra.mxu0 0.0
        %334 = vmatprep.subr.mxu0 0.0
        %335 = vmatpush1.msra.mxu0 0.0
        %336 = vmatprep.subr.mxu0 0.0
        %337 = vmatpush1.msra.mxu0 0.0
        %338 = vmatprep.subr.mxu0 0.0
        %339 = vmatpush1.msra.mxu0 0.0
        %340 = vmatprep.subr.mxu0 0.0
        %341 = vmatpush1.msra.mxu0 0.0
        %342 = vmatprep.subr.mxu0 0.0
        %343 = vmatpush1.msra.mxu0 0.0
        %344 = vmatprep.subr.mxu0 0.0
        %345 = vmatpush1.msra.mxu0 0.0
        %346 = vmatprep.subr.mxu0 0.0
        %347 = vmatpush1.msra.mxu0 0.0
        %348 = vmatprep.subr.mxu0 0.0
        %349 = vmatpush1.msra.mxu0 0.0
        %350 = vmatprep.subr.mxu0 0.0
        %351 = vmatpush1.msra.mxu0 0.0
        %352 = vmatprep.subr.mxu0 0.0
        %353 = vmatpush1.msra.mxu0 0.0
        %354 = vmatprep.subr.mxu0 0.0
        %355 = vmatpush1.msra.mxu0 0.0
        %356 = vmatprep.mubr.f32.mxu0 0.0
        %357 = vmatmul.mubr.f32.gmra.mrb[0].mxu0 %v290
        %v358 = vpop.f32.mrb[0].mxu0
        %v359 = vadd.f32 0.0, %v358
        %v360 = vpop.f32.mrb[0].mxu0
        %361 = vdwg.mxu0
        %v362 = vmul.f32 %v359, 2.0
        %v364 = vlaneseq
        %v365 = vshrl.u32 %v364, 7
        %v366 = vsub.s32 0, %v365
        %v367 = vrot.slane %v286, %v366
        %v369 = vsub.f32 %v367, %v362
        %s370 = smul.u32 %s23, 128
        %v371 = vlaneseq
        %v372 = vand.u32 %v371, 127
        %v373 = vstv %s370
        %v374 = vadd.s32 %v373, %v372
        %v375 = vld [vmem:[#allocation2] sm:$0xff]
        %376 = vset.pattern.permute.xlu0 0
        %377 = vperm.xlu0 %376, %v287
        %v378 = vpop.permute.xlu0 %377
        %vm379 = vcmp.eq.s32.totalorder %v374, %v378
        %v380 = vsel %vm379, %v369, 0.0
        %381 = vadd.xlane.f32.xlu0 %v380
        %v382 = vpop.xlane.xlu0 %381
        %v383 = vadd.f32 %v375, %v382
        %vm384 = vcmask 7168
        %385 = vst.msk [vmem:[#allocation2] sm:$0xff] %vm384, %v383
        %p386 = scmp.eq.s32.totalorder %s23, 1
        // Predicated region
        $region45: #{tpu_custom_call.1} parent=35 // pred_check
          %p387 = pneg %p386
        $region46: #{tpu_custom_call.1} parent=35 // pred_check_branch
          %389 = sbr.rel (%p387) target = $region48
        $region47: #{tpu_custom_call.1} parent=35 // pred_region
          %v390 = vmul.f32 %v281, %v281
          %v391 = vsel %vm288, %v390, 0.0
          %392 = vadd.xlane.f32.xlu0 %v391
          %v393 = vpop.xlane.xlu0 %392
          %v394 = vld [vmem:[#allocation2] sm:$0xff]
          %v395 = vadd.f32 %v393, %v394
          %v396 = vmax.f32 %v395, 1e-12
          %v397 = vmin.f32 %v396, 1e+12
          %s398 = smul.u32 %s22, 8
          %v399 = vlaneseq
          %v400 = vshrl.u32 %v399, 7
          %v401 = vstv %s398
          %v402 = vadd.s32 %v401, %v400
          %vm403 = vcmp.lt.s32.totalorder %v402, 20
          %v404 = vsel %vm403, %v397, 0.0
          %405 = vst.msk [vmem:[%s274] sm:$0xff] %vm384, %v404
        $region48: #{tpu_custom_call.1} parent=35 // pred_fallthru
          _
        %p406 = scmp.lt.s32.totalorder %s22, 2
        %s407 = scalar_select %p406, %s22, 2
        %s408 = smul.addr %s407, 8
        %s409 = scalar_lea.vmem %s4, %s408
        // Predicated region
        $region49: #{tpu_custom_call.1} parent=35 // pred_check
          %p410 = pneg %p152
        $region50: #{tpu_custom_call.1} parent=35 // pred_check_branch
          %412 = sbr.rel (%p410) target = $region52
        $region51: #{tpu_custom_call.1} parent=35 // pred_region
          _
        $region52: #{tpu_custom_call.1} parent=35 // pred_fallthru
          _
      $region36: #{tpu_custom_call.1} parent=5 // pred_fallthru
        _
      %p413 = scmp.le.s32.totalorder 2, %s13
      // Predicated region
      $region53: #{tpu_custom_call.1} parent=5 // pred_check
        %p414 = pneg %p413
      $region54: #{tpu_custom_call.1} parent=5 // pred_check_branch
        %416 = sbr.rel (%p414) target = $region56
      $region55: #{tpu_custom_call.1} parent=5 // pred_region
        %s417 = ssub.s32 %s13, 2
        // Predicated region
        $region57: #{tpu_custom_call.1} parent=55 // pred_check
          %p418 = pneg %p158
        $region58: #{tpu_custom_call.1} parent=55 // pred_check_branch
          %420 = sbr.rel (%p418) target = $region60
        $region59: #{tpu_custom_call.1} parent=55 // pred_region
          %p421 = scmp.lt.s32.totalorder %s24, 2
          %s422 = scalar_select %p421, %s24, 2
          %s423 = smul.addr %s422, 8
          %s424 = scalar_lea.vmem %s4, %s423
        $region60: #{tpu_custom_call.1} parent=55 // pred_fallthru
          _
      $region56: #{tpu_custom_call.1} parent=5 // pred_fallthru
        _
    $region6: #{tpu_custom_call.1} parent=1 // loop_footer
      %s17 = sadd.s32 1, %s13
    $region7: #{tpu_custom_call.1} parent=1 // loop_footer_branch
      %12 = sbr.rel target = $region3
    $region8: #{tpu_custom_call.1} parent=1 // loop_exit
      _
    %425 = vsyncpa [#allocation4], 1
    %s426 = scalar_lea.sflag [#allocation4], 1
    %427 = vsyncpa %s426, 1

</llo_original>
